<compile_context>
chip_gen: v7x
topology: tpu7x:2x2x1
jax: 0.10.0
libtpu: 0.0.40
codegen_flags: <defaults>
</compile_context>

<pallas_src>
import functools

import jax
import jax.numpy as jnp
from jax.experimental import pallas as pl
from jax.experimental.pallas import tpu as pltpu


_NEG_SLOPE = 0.01  # PyTorch nn.LeakyReLU default


def _round_up(x, m):
    return ((x + m - 1) // m) * m


def _cdiv(a, b):
    return (a + b - 1) // b


def _default_epilogue_dtype():
    """bf16 epilogue on chips with native bf16 VALUs (v6e / v7x); f32 elsewhere."""
    try:
        kind = jax.devices()[0].device_kind.lower()
    except Exception:
        return jnp.float32
    if ("v6" in kind) or ("v7" in kind) or ("tpu7" in kind):
        return jnp.bfloat16
    return jnp.float32


def neural_kernel(x_ref, *refs, num_chains, epi_dtype):
    """Fused 7x (Linear + LeakyReLU) on one batch tile.

    Layout (lane-dense batch):
      x_ref : (n_stokes, TILE_B)  bf16  -- batch on the 128-lane axis
      refs  : w1, b1, ..., w7, b7, o_ref
        w*  : (out, in)           bf16  -- VMEM-resident across grid steps
        b*  : (out, 1)            epi_dtype
      o_ref : (n_latent, TILE_B)  f32

    The tile is split into `num_chains` independent column sub-chains so the
    scheduler can interleave their MXU pushes / VPU epilogues.
    """
    o_ref = refs[-1]
    wb = refs[:-1]                      # (w1, b1, ..., w7, b7)
    n_layers = len(wb) // 2
    tile_b = x_ref.shape[-1]
    cw = tile_b // num_chains
    neg = jnp.asarray(_NEG_SLOPE, dtype=epi_dtype)

    # Independent column sub-chains (bf16 activations feeding the MXU).
    hs = [x_ref[:, c * cw:(c + 1) * cw] for c in range(num_chains)]

    for l in range(n_layers):
        w = wb[2 * l][...]              # load each weight/bias once per layer
        b = wb[2 * l + 1][...]
        last = (l == n_layers - 1)
        new_hs = []
        for h in hs:
            # bf16 operands on the MXU, f32 accumulation.
            y = jnp.dot(w, h, preferred_element_type=jnp.float32)
            # Bias + LeakyReLU in epi_dtype (bf16 on v6e/v7x, f32 on v5e).
            y = y.astype(epi_dtype) + b
            y = jnp.maximum(y, neg * y)                 # LeakyReLU, 2 ops/elem
            new_hs.append(y if last else y.astype(jnp.bfloat16))
        hs = new_hs

    for c in range(num_chains):
        o_ref[:, c * cw:(c + 1) * cw] = hs[c].astype(o_ref.dtype)


def neural_forward(x, params, *, tile_b_max=1024, epilogue_dtype=None,
                   batch_major_output=True):
    """x: (batch, n_stokes) float.
    params: list of 7 (W, b); W (out_features, in_features), b (out_features,) or (out,1).
    Returns (batch, n_latent) f32 (or (n_latent, batch) if batch_major_output=False,
    which avoids the post-kernel transpose entirely)."""
    batch, n_stokes = x.shape
    n_hidden = params[0][0].shape[0]
    n_latent = params[-1][0].shape[0]

    if epilogue_dtype is None:
        epilogue_dtype = _default_epilogue_dtype()

    # Tile selection: 128-aligned, aim for >= 2 grid steps (v7x megacore),
    # capped by tile_b_max (vreg pressure, not VMEM, is the real ceiling).
    b128 = _round_up(batch, 128)
    half = _round_up(_cdiv(b128, 2), 128)
    tile_b = _round_up(max(128, min(int(tile_b_max), half)), 128)
    padded = _round_up(batch, tile_b)
    grid = (padded // tile_b,)
    # Two interleaved column sub-chains only when each half stays lane-aligned.
    num_chains = 2 if (tile_b % 256 == 0) else 1

    # Lane-dense layout: (features, padded_batch); bf16 halves the x DMA bytes.
    x_t = jnp.pad(x.astype(jnp.float32),
                  ((0, padded - batch), (0, 0))).T.astype(jnp.bfloat16)

    flat_args = [x_t]
    in_specs = [pl.BlockSpec((n_stokes, tile_b), lambda i: (0, i))]
    for w, b in params:
        w_bf = jnp.asarray(w, jnp.float32).astype(jnp.bfloat16)          # (out, in)
        b_c = jnp.asarray(b, jnp.float32).reshape(-1, 1).astype(epilogue_dtype)  # (out, 1)
        flat_args += [w_bf, b_c]
        in_specs += [pl.BlockSpec(w_bf.shape, lambda i: (0, 0)),         # resident weight
                     pl.BlockSpec(b_c.shape, lambda i: (0, 0))]          # resident bias

    flops = 2 * padded * (n_stokes * n_hidden
                          + 5 * n_hidden * n_hidden
                          + n_hidden * n_latent)
    bias_bytes = jnp.dtype(epilogue_dtype).itemsize
    bytes_accessed = (x_t.size * 2                       # bf16 input
                      + padded * n_latent * 4            # f32 output
                      + sum(jnp.asarray(w).size * 2 + jnp.asarray(b).size * bias_bytes
                            for w, b in params))

    kernel = functools.partial(neural_kernel,
                               num_chains=num_chains,
                               epi_dtype=epilogue_dtype)

    out_t = pl.pallas_call(
        kernel,
        out_shape=jax.ShapeDtypeStruct((n_latent, padded), jnp.float32),
        grid=grid,
        in_specs=in_specs,
        out_specs=pl.BlockSpec((n_latent, tile_b), lambda i: (0, i)),
        compiler_params=pltpu.CompilerParams(
            dimension_semantics=("parallel",),            # shard batch tiles across TCs
            vmem_limit_bytes=32 * 1024 * 1024),           # footprint < 1 MiB; not a limiter
        cost_estimate=pl.CostEstimate(flops=flops,
                                      transcendentals=0,
                                      bytes_accessed=bytes_accessed),
    )(*flat_args)

    if batch_major_output:
        return out_t[:, :batch].T                         # (batch, n_latent)
    return out_t[:, :batch]                               # (n_latent, batch), no transpose


def init_params(key, n_stokes, n_latent, n_hidden):
    """Deterministic kaiming-normal init (matches weights_init semantics):
       std = sqrt(2 / fan_in), bias = 0.  Weights stored as (out, in)."""
    dims = [n_stokes] + [n_hidden] * 6 + [n_latent]
    params = []
    for i in range(7):
        fan_in, fan_out = dims[i], dims[i + 1]
        key, sub = jax.random.split(key)
        std = (2.0 / fan_in) ** 0.5
        w = std * jax.random.normal(sub, (fan_out, fan_in), dtype=jnp.float32)
        b = jnp.zeros((fan_out, 1), dtype=jnp.float32)
        params.append((w, b))
    return params


def neural_forward_ref(x, params, *, epilogue_dtype=jnp.float32, bf16_matmul=True):
    """Pure-JAX reference.  bf16_matmul=True + epilogue_dtype matching the kernel
    gives a tight precision-matched check; bf16_matmul=False gives true f32
    (PyTorch-like) semantics."""
    h = jnp.asarray(x, jnp.float32).T                    # (features, batch)
    n_layers = len(params)
    neg = jnp.asarray(_NEG_SLOPE, dtype=epilogue_dtype)
    for l, (w, b) in enumerate(params):
        if bf16_matmul:
            y = jnp.dot(w.astype(jnp.bfloat16), h.astype(jnp.bfloat16),
                        preferred_element_type=jnp.float32)
        else:
            y = jnp.dot(jnp.asarray(w, jnp.float32), h.astype(jnp.float32))
        b_c = jnp.asarray(b, jnp.float32).reshape(-1, 1).astype(epilogue_dtype)
        y = y.astype(epilogue_dtype) + b_c
        y = jnp.maximum(y, neg * y)
        if bf16_matmul and l < n_layers - 1:
            h = y.astype(jnp.bfloat16)
        else:
            h = y
    return h.astype(jnp.float32).T


if __name__ == "__main__":
    n_stokes, n_latent, n_hidden = 4, 8, 32

    key = jax.random.PRNGKey(0)
    key, kx1, kx2 = jax.random.split(key, 3)
    params = init_params(key, n_stokes, n_latent, n_hidden)
    epi = _default_epilogue_dtype()

    # Case 1: tiny batch -> grid=(1,), single column chain.
    x1 = jax.random.normal(kx1, (8, n_stokes), dtype=jnp.float32)
    out1 = jax.block_until_ready(neural_forward(x1, params))
    ref1 = neural_forward_ref(x1, params, epilogue_dtype=epi, bf16_matmul=True)
    ref1_f32 = neural_forward_ref(x1, params, epilogue_dtype=jnp.float32, bf16_matmul=False)
    assert out1.shape == (8, n_latent)
    assert jnp.allclose(out1, ref1, atol=1e-2, rtol=1e-2)          # precision-matched
    assert jnp.allclose(out1, ref1_f32, atol=5e-2, rtol=5e-2)      # true f32 semantics

    # Case 2: ragged batch -> padded, grid=(2,), two interleaved column chains.
    x2 = jax.random.normal(kx2, (300, n_stokes), dtype=jnp.float32)
    out2 = jax.block_until_ready(neural_forward(x2, params))
    ref2 = neural_forward_ref(x2, params, epilogue_dtype=epi, bf16_matmul=True)
    ref2_f32 = neural_forward_ref(x2, params, epilogue_dtype=jnp.float32, bf16_matmul=False)
    assert out2.shape == (300, n_latent)
    assert jnp.allclose(out2, ref2, atol=1e-2, rtol=1e-2)
    assert jnp.allclose(out2, ref2_f32, atol=5e-2, rtol=5e-2)

    print("KERNEL_OK")
</pallas_src>

<mosaic_0001>
module attributes {stable_mosaic.version = 11 : i64} {
  func.func @neural_kernel(%arg0: i32, %arg1: memref<4x128xbf16, #tpu.memory_space<vmem>>, %arg2: memref<32x4xbf16, #tpu.memory_space<vmem>>, %arg3: memref<32x1xf32, #tpu.memory_space<vmem>>, %arg4: memref<32x32xbf16, #tpu.memory_space<vmem>>, %arg5: memref<32x1xf32, #tpu.memory_space<vmem>>, %arg6: memref<32x32xbf16, #tpu.memory_space<vmem>>, %arg7: memref<32x1xf32, #tpu.memory_space<vmem>>, %arg8: memref<32x32xbf16, #tpu.memory_space<vmem>>, %arg9: memref<32x1xf32, #tpu.memory_space<vmem>>, %arg10: memref<32x32xbf16, #tpu.memory_space<vmem>>, %arg11: memref<32x1xf32, #tpu.memory_space<vmem>>, %arg12: memref<32x32xbf16, #tpu.memory_space<vmem>>, %arg13: memref<32x1xf32, #tpu.memory_space<vmem>>, %arg14: memref<8x32xbf16, #tpu.memory_space<vmem>>, %arg15: memref<8x1xf32, #tpu.memory_space<vmem>>, %arg16: memref<8x128xf32, #tpu.memory_space<vmem>>) attributes {dimension_semantics = [#tpu.dimension_semantics<parallel>], iteration_bounds = array<i64: 1>, scalar_prefetch = 0 : i64, scratch_operands = 0 : i64, tpu.core_type = #tpu.core_type<tc>, window_params = [{transform_indices = @transform_0, window_bounds = array<i64: 4, 128>}, {pipeline_mode = #tpu.pipeline_mode<synchronous>, transform_indices = @transform_1, window_bounds = array<i64: 32, 4>}, {pipeline_mode = #tpu.pipeline_mode<synchronous>, transform_indices = @transform_2, window_bounds = array<i64: 32, 1>}, {pipeline_mode = #tpu.pipeline_mode<synchronous>, transform_indices = @transform_3, window_bounds = array<i64: 32, 32>}, {pipeline_mode = #tpu.pipeline_mode<synchronous>, transform_indices = @transform_4, window_bounds = array<i64: 32, 1>}, {pipeline_mode = #tpu.pipeline_mode<synchronous>, transform_indices = @transform_5, window_bounds = array<i64: 32, 32>}, {pipeline_mode = #tpu.pipeline_mode<synchronous>, transform_indices = @transform_6, window_bounds = array<i64: 32, 1>}, {pipeline_mode = #tpu.pipeline_mode<synchronous>, transform_indices = @transform_7, window_bounds = array<i64: 32, 32>}, {pipeline_mode = #tpu.pipeline_mode<synchronous>, transform_indices = @transform_8, window_bounds = array<i64: 32, 1>}, {pipeline_mode = #tpu.pipeline_mode<synchronous>, transform_indices = @transform_9, window_bounds = array<i64: 32, 32>}, {pipeline_mode = #tpu.pipeline_mode<synchronous>, transform_indices = @transform_10, window_bounds = array<i64: 32, 1>}, {pipeline_mode = #tpu.pipeline_mode<synchronous>, transform_indices = @transform_11, window_bounds = array<i64: 32, 32>}, {pipeline_mode = #tpu.pipeline_mode<synchronous>, transform_indices = @transform_12, window_bounds = array<i64: 32, 1>}, {pipeline_mode = #tpu.pipeline_mode<synchronous>, transform_indices = @transform_13, window_bounds = array<i64: 8, 32>}, {pipeline_mode = #tpu.pipeline_mode<synchronous>, transform_indices = @transform_14, window_bounds = array<i64: 8, 1>}, {transform_indices = @transform_15, window_bounds = array<i64: 8, 128>}]} {
    %c0 = arith.constant 0 : index
    %c0_0 = arith.constant 0 : index
    %0 = vector.load %arg1[%c0, %c0_0] : memref<4x128xbf16, #tpu.memory_space<vmem>>, vector<4x128xbf16>
    %c0_1 = arith.constant 0 : index
    %c0_2 = arith.constant 0 : index
    %1 = vector.load %arg2[%c0_1, %c0_2] : memref<32x4xbf16, #tpu.memory_space<vmem>>, vector<32x4xbf16>
    %c0_3 = arith.constant 0 : index
    %c0_4 = arith.constant 0 : index
    %2 = vector.load %arg3[%c0_3, %c0_4] : memref<32x1xf32, #tpu.memory_space<vmem>>, vector<32x1xf32>
    %cst = arith.constant dense<0.000000e+00> : vector<32x128xf32>
    %3 = tpu.matmul %1, %0, %cst {dimension_numbers = #tpu.dot_dimension_numbers<[1], [0], [0], [1], [0, 0, 1, 1], [], []>} : vector<32x4xbf16>, vector<4x128xbf16>, vector<32x128xf32> -> vector<32x128xf32>
    %4 = vector.broadcast %2 : vector<32x1xf32> to vector<32x128xf32>
    %5 = arith.addf %3, %4 : vector<32x128xf32>
    %cst_5 = arith.constant 0.00999999977 : f32
    %6 = vector.broadcast %cst_5 : f32 to vector<32x128xf32>
    %7 = arith.mulf %6, %5 : vector<32x128xf32>
    %8 = arith.maximumf %5, %7 : vector<32x128xf32>
    %9 = arith.truncf %8 : vector<32x128xf32> to vector<32x128xbf16>
    %c0_6 = arith.constant 0 : index
    %c0_7 = arith.constant 0 : index
    %10 = vector.load %arg4[%c0_6, %c0_7] : memref<32x32xbf16, #tpu.memory_space<vmem>>, vector<32x32xbf16>
    %c0_8 = arith.constant 0 : index
    %c0_9 = arith.constant 0 : index
    %11 = vector.load %arg5[%c0_8, %c0_9] : memref<32x1xf32, #tpu.memory_space<vmem>>, vector<32x1xf32>
    %cst_10 = arith.constant dense<0.000000e+00> : vector<32x128xf32>
    %12 = tpu.matmul %10, %9, %cst_10 {dimension_numbers = #tpu.dot_dimension_numbers<[1], [0], [0], [1], [0, 0, 1, 1], [], []>} : vector<32x32xbf16>, vector<32x128xbf16>, vector<32x128xf32> -> vector<32x128xf32>
    %13 = vector.broadcast %11 : vector<32x1xf32> to vector<32x128xf32>
    %14 = arith.addf %12, %13 : vector<32x128xf32>
    %cst_11 = arith.constant 0.00999999977 : f32
    %15 = vector.broadcast %cst_11 : f32 to vector<32x128xf32>
    %16 = arith.mulf %15, %14 : vector<32x128xf32>
    %17 = arith.maximumf %14, %16 : vector<32x128xf32>
    %18 = arith.truncf %17 : vector<32x128xf32> to vector<32x128xbf16>
    %c0_12 = arith.constant 0 : index
    %c0_13 = arith.constant 0 : index
    %19 = vector.load %arg6[%c0_12, %c0_13] : memref<32x32xbf16, #tpu.memory_space<vmem>>, vector<32x32xbf16>
    %c0_14 = arith.constant 0 : index
    %c0_15 = arith.constant 0 : index
    %20 = vector.load %arg7[%c0_14, %c0_15] : memref<32x1xf32, #tpu.memory_space<vmem>>, vector<32x1xf32>
    %cst_16 = arith.constant dense<0.000000e+00> : vector<32x128xf32>
    %21 = tpu.matmul %19, %18, %cst_16 {dimension_numbers = #tpu.dot_dimension_numbers<[1], [0], [0], [1], [0, 0, 1, 1], [], []>} : vector<32x32xbf16>, vector<32x128xbf16>, vector<32x128xf32> -> vector<32x128xf32>
    %22 = vector.broadcast %20 : vector<32x1xf32> to vector<32x128xf32>
    %23 = arith.addf %21, %22 : vector<32x128xf32>
    %cst_17 = arith.constant 0.00999999977 : f32
    %24 = vector.broadcast %cst_17 : f32 to vector<32x128xf32>
    %25 = arith.mulf %24, %23 : vector<32x128xf32>
    %26 = arith.maximumf %23, %25 : vector<32x128xf32>
    %27 = arith.truncf %26 : vector<32x128xf32> to vector<32x128xbf16>
    %c0_18 = arith.constant 0 : index
    %c0_19 = arith.constant 0 : index
    %28 = vector.load %arg8[%c0_18, %c0_19] : memref<32x32xbf16, #tpu.memory_space<vmem>>, vector<32x32xbf16>
    %c0_20 = arith.constant 0 : index
    %c0_21 = arith.constant 0 : index
    %29 = vector.load %arg9[%c0_20, %c0_21] : memref<32x1xf32, #tpu.memory_space<vmem>>, vector<32x1xf32>
    %cst_22 = arith.constant dense<0.000000e+00> : vector<32x128xf32>
    %30 = tpu.matmul %28, %27, %cst_22 {dimension_numbers = #tpu.dot_dimension_numbers<[1], [0], [0], [1], [0, 0, 1, 1], [], []>} : vector<32x32xbf16>, vector<32x128xbf16>, vector<32x128xf32> -> vector<32x128xf32>
    %31 = vector.broadcast %29 : vector<32x1xf32> to vector<32x128xf32>
    %32 = arith.addf %30, %31 : vector<32x128xf32>
    %cst_23 = arith.constant 0.00999999977 : f32
    %33 = vector.broadcast %cst_23 : f32 to vector<32x128xf32>
    %34 = arith.mulf %33, %32 : vector<32x128xf32>
    %35 = arith.maximumf %32, %34 : vector<32x128xf32>
    %36 = arith.truncf %35 : vector<32x128xf32> to vector<32x128xbf16>
    %c0_24 = arith.constant 0 : index
    %c0_25 = arith.constant 0 : index
    %37 = vector.load %arg10[%c0_24, %c0_25] : memref<32x32xbf16, #tpu.memory_space<vmem>>, vector<32x32xbf16>
    %c0_26 = arith.constant 0 : index
    %c0_27 = arith.constant 0 : index
    %38 = vector.load %arg11[%c0_26, %c0_27] : memref<32x1xf32, #tpu.memory_space<vmem>>, vector<32x1xf32>
    %cst_28 = arith.constant dense<0.000000e+00> : vector<32x128xf32>
    %39 = tpu.matmul %37, %36, %cst_28 {dimension_numbers = #tpu.dot_dimension_numbers<[1], [0], [0], [1], [0, 0, 1, 1], [], []>} : vector<32x32xbf16>, vector<32x128xbf16>, vector<32x128xf32> -> vector<32x128xf32>
    %40 = vector.broadcast %38 : vector<32x1xf32> to vector<32x128xf32>
    %41 = arith.addf %39, %40 : vector<32x128xf32>
    %cst_29 = arith.constant 0.00999999977 : f32
    %42 = vector.broadcast %cst_29 : f32 to vector<32x128xf32>
    %43 = arith.mulf %42, %41 : vector<32x128xf32>
    %44 = arith.maximumf %41, %43 : vector<32x128xf32>
    %45 = arith.truncf %44 : vector<32x128xf32> to vector<32x128xbf16>
    %c0_30 = arith.constant 0 : index
    %c0_31 = arith.constant 0 : index
    %46 = vector.load %arg12[%c0_30, %c0_31] : memref<32x32xbf16, #tpu.memory_space<vmem>>, vector<32x32xbf16>
    %c0_32 = arith.constant 0 : index
    %c0_33 = arith.constant 0 : index
    %47 = vector.load %arg13[%c0_32, %c0_33] : memref<32x1xf32, #tpu.memory_space<vmem>>, vector<32x1xf32>
    %cst_34 = arith.constant dense<0.000000e+00> : vector<32x128xf32>
    %48 = tpu.matmul %46, %45, %cst_34 {dimension_numbers = #tpu.dot_dimension_numbers<[1], [0], [0], [1], [0, 0, 1, 1], [], []>} : vector<32x32xbf16>, vector<32x128xbf16>, vector<32x128xf32> -> vector<32x128xf32>
    %49 = vector.broadcast %47 : vector<32x1xf32> to vector<32x128xf32>
    %50 = arith.addf %48, %49 : vector<32x128xf32>
    %cst_35 = arith.constant 0.00999999977 : f32
    %51 = vector.broadcast %cst_35 : f32 to vector<32x128xf32>
    %52 = arith.mulf %51, %50 : vector<32x128xf32>
    %53 = arith.maximumf %50, %52 : vector<32x128xf32>
    %54 = arith.truncf %53 : vector<32x128xf32> to vector<32x128xbf16>
    %c0_36 = arith.constant 0 : index
    %c0_37 = arith.constant 0 : index
    %55 = vector.load %arg14[%c0_36, %c0_37] : memref<8x32xbf16, #tpu.memory_space<vmem>>, vector<8x32xbf16>
    %c0_38 = arith.constant 0 : index
    %c0_39 = arith.constant 0 : index
    %56 = vector.load %arg15[%c0_38, %c0_39] : memref<8x1xf32, #tpu.memory_space<vmem>>, vector<8x1xf32>
    %cst_40 = arith.constant dense<0.000000e+00> : vector<8x128xf32>
    %57 = tpu.matmul %55, %54, %cst_40 {dimension_numbers = #tpu.dot_dimension_numbers<[1], [0], [0], [1], [0, 0, 1, 1], [], []>} : vector<8x32xbf16>, vector<32x128xbf16>, vector<8x128xf32> -> vector<8x128xf32>
    %58 = vector.broadcast %56 : vector<8x1xf32> to vector<8x128xf32>
    %59 = arith.addf %57, %58 : vector<8x128xf32>
    %cst_41 = arith.constant 0.00999999977 : f32
    %60 = vector.broadcast %cst_41 : f32 to vector<8x128xf32>
    %61 = arith.mulf %60, %59 : vector<8x128xf32>
    %62 = arith.maximumf %59, %61 : vector<8x128xf32>
    %c0_42 = arith.constant 0 : index
    %c0_43 = arith.constant 0 : index
    %63 = vector.load %arg16[%c0_42, %c0_43] : memref<8x128xf32, #tpu.memory_space<vmem>>, vector<8x128xf32>
    tpu.vector_store %arg16[%c0_42, %c0_43], %62 {strides = array<i32>} : memref<8x128xf32, #tpu.memory_space<vmem>>, vector<8x128xf32>,
    return
  }
  func.func @transform_0(%arg0: i32) -> (i32, i32) {
    %c0_i32 = arith.constant 0 : i32
    %c0_i32_0 = arith.constant 0 : i32
    return %c0_i32, %arg0 : i32, i32
  }
  func.func @transform_1(%arg0: i32) -> (i32, i32) {
    %c0_i32 = arith.constant 0 : i32
    %c0_i32_0 = arith.constant 0 : i32
    %c0_i32_1 = arith.constant 0 : i32
    return %c0_i32, %c0_i32_0 : i32, i32
  }
  func.func @transform_2(%arg0: i32) -> (i32, i32) {
    %c0_i32 = arith.constant 0 : i32
    %c0_i32_0 = arith.constant 0 : i32
    %c0_i32_1 = arith.constant 0 : i32
    return %c0_i32, %c0_i32_0 : i32, i32
  }
  func.func @transform_3(%arg0: i32) -> (i32, i32) {
    %c0_i32 = arith.constant 0 : i32
    %c0_i32_0 = arith.constant 0 : i32
    %c0_i32_1 = arith.constant 0 : i32
    return %c0_i32, %c0_i32_0 : i32, i32
  }
  func.func @transform_4(%arg0: i32) -> (i32, i32) {
    %c0_i32 = arith.constant 0 : i32
    %c0_i32_0 = arith.constant 0 : i32
    %c0_i32_1 = arith.constant 0 : i32
    return %c0_i32, %c0_i32_0 : i32, i32
  }
  func.func @transform_5(%arg0: i32) -> (i32, i32) {
    %c0_i32 = arith.constant 0 : i32
    %c0_i32_0 = arith.constant 0 : i32
    %c0_i32_1 = arith.constant 0 : i32
    return %c0_i32, %c0_i32_0 : i32, i32
  }
  func.func @transform_6(%arg0: i32) -> (i32, i32) {
    %c0_i32 = arith.constant 0 : i32
    %c0_i32_0 = arith.constant 0 : i32
    %c0_i32_1 = arith.constant 0 : i32
    return %c0_i32, %c0_i32_0 : i32, i32
  }
  func.func @transform_7(%arg0: i32) -> (i32, i32) {
    %c0_i32 = arith.constant 0 : i32
    %c0_i32_0 = arith.constant 0 : i32
    %c0_i32_1 = arith.constant 0 : i32
    return %c0_i32, %c0_i32_0 : i32, i32
  }
  func.func @transform_8(%arg0: i32) -> (i32, i32) {
    %c0_i32 = arith.constant 0 : i32
    %c0_i32_0 = arith.constant 0 : i32
    %c0_i32_1 = arith.constant 0 : i32
    return %c0_i32, %c0_i32_0 : i32, i32
  }
  func.func @transform_9(%arg0: i32) -> (i32, i32) {
    %c0_i32 = arith.constant 0 : i32
    %c0_i32_0 = arith.constant 0 : i32
    %c0_i32_1 = arith.constant 0 : i32
    return %c0_i32, %c0_i32_0 : i32, i32
  }
  func.func @transform_10(%arg0: i32) -> (i32, i32) {
    %c0_i32 = arith.constant 0 : i32
    %c0_i32_0 = arith.constant 0 : i32
    %c0_i32_1 = arith.constant 0 : i32
    return %c0_i32, %c0_i32_0 : i32, i32
  }
  func.func @transform_11(%arg0: i32) -> (i32, i32) {
    %c0_i32 = arith.constant 0 : i32
    %c0_i32_0 = arith.constant 0 : i32
    %c0_i32_1 = arith.constant 0 : i32
    return %c0_i32, %c0_i32_0 : i32, i32
  }
  func.func @transform_12(%arg0: i32) -> (i32, i32) {
    %c0_i32 = arith.constant 0 : i32
    %c0_i32_0 = arith.constant 0 : i32
    %c0_i32_1 = arith.constant 0 : i32
    return %c0_i32, %c0_i32_0 : i32, i32
  }
  func.func @transform_13(%arg0: i32) -> (i32, i32) {
    %c0_i32 = arith.constant 0 : i32
    %c0_i32_0 = arith.constant 0 : i32
    %c0_i32_1 = arith.constant 0 : i32
    return %c0_i32, %c0_i32_0 : i32, i32
  }
  func.func @transform_14(%arg0: i32) -> (i32, i32) {
    %c0_i32 = arith.constant 0 : i32
    %c0_i32_0 = arith.constant 0 : i32
    %c0_i32_1 = arith.constant 0 : i32
    return %c0_i32, %c0_i32_0 : i32, i32
  }
  func.func @transform_15(%arg0: i32) -> (i32, i32) {
    %c0_i32 = arith.constant 0 : i32
    %c0_i32_0 = arith.constant 0 : i32
    return %c0_i32, %arg0 : i32, i32
  }
}

</mosaic_0001>

<llo_original>
// kernel: tpu_custom_call.1
$region0: #{tpu_custom_call.1}
  #allocation0 [shape = 'u32[]', space=smem, size = 0x4, offset = 0x4, fixed_abs, tag = 'smem constant byte address 0x4 - core index']
  #allocation1 [shape = 'u32[144,128]{1,0:T(1,128)}', space=vmem, size = 0x12000, scoped, tag = 'internal scratch']
  %s0 = inlined_call_operand.vmem [shape: bf16[4,128], index: 0, kind: input, shape index: {}]
  %s1 = inlined_call_operand.vmem [shape: bf16[32,4], index: 1, kind: input, shape index: {}]
  %s2 = inlined_call_operand.vmem [shape: f32[32,1], index: 2, kind: input, shape index: {}]
  %s3 = inlined_call_operand.vmem [shape: bf16[32,32], index: 3, kind: input, shape index: {}]
  %s4 = inlined_call_operand.vmem [shape: f32[32,1], index: 4, kind: input, shape index: {}]
  %s5 = inlined_call_operand.vmem [shape: bf16[32,32], index: 5, kind: input, shape index: {}]
  %s6 = inlined_call_operand.vmem [shape: f32[32,1], index: 6, kind: input, shape index: {}]
  %s7 = inlined_call_operand.vmem [shape: bf16[32,32], index: 7, kind: input, shape index: {}]
  %s8 = inlined_call_operand.vmem [shape: f32[32,1], index: 8, kind: input, shape index: {}]
  %s9 = inlined_call_operand.vmem [shape: bf16[32,32], index: 9, kind: input, shape index: {}]
  %s10 = inlined_call_operand.vmem [shape: f32[32,1], index: 10, kind: input, shape index: {}]
  %s11 = inlined_call_operand.vmem [shape: bf16[32,32], index: 11, kind: input, shape index: {}]
  %s12 = inlined_call_operand.vmem [shape: f32[32,1], index: 12, kind: input, shape index: {}]
  %s13 = inlined_call_operand.vmem [shape: bf16[8,32], index: 13, kind: input, shape index: {}]
  %s14 = inlined_call_operand.vmem [shape: f32[8,1], index: 14, kind: input, shape index: {}]
  %s15 = inlined_call_operand.hbm [shape: f32[8,128], index: 15, kind: output, shape index: {}]
  %s16 = sld [smem:[#allocation0]]
  $region70: #{tpu_custom_call.1} parent=0
    _
  %s18 = ssub.s32 1, %s16
  %s19 = scalar_select 0, %s18, %s16
  $region1: #{tpu_custom_call.1} parent=0
    #allocation2 [shape = 'u8[4096]{0}', space=vmem, size = 0x1000, scoped, tag = 'output window, operand 0, single buffered']
    #allocation3 [shape = 's32[1]{0}', space=sflag, size = 0x4, scoped, tag = 'scoped memory for tpu_custom_call.1']
    %20 = vsyncpa [#allocation3], 0
    // Predicated region
    $region2: #{tpu_custom_call.1} parent=1 // pred_check
      _
    $region3: #{tpu_custom_call.1} parent=1 // pred_check_branch
      %22 = sbr.rel (0) target = $region5
    $region4: #{tpu_custom_call.1} parent=1 // pred_region
      _
    $region5: #{tpu_custom_call.1} parent=1 // pred_fallthru
      _
    // Predicated region
    $region6: #{tpu_custom_call.1} parent=1 // pred_check
      _
    $region7: #{tpu_custom_call.1} parent=1 // pred_check_branch
      %24 = sbr.rel (0) target = $region9
    $region8: #{tpu_custom_call.1} parent=1 // pred_region
      _
    $region9: #{tpu_custom_call.1} parent=1 // pred_fallthru
      _
    // Predicated region
    $region10: #{tpu_custom_call.1} parent=1 // pred_check
      _
    $region11: #{tpu_custom_call.1} parent=1 // pred_check_branch
      %26 = sbr.rel (0) target = $region13
    $region12: #{tpu_custom_call.1} parent=1 // pred_region
      _
    $region13: #{tpu_custom_call.1} parent=1 // pred_fallthru
      _
    // Predicated region
    $region14: #{tpu_custom_call.1} parent=1 // pred_check
      _
    $region15: #{tpu_custom_call.1} parent=1 // pred_check_branch
      %28 = sbr.rel (0) target = $region17
    $region16: #{tpu_custom_call.1} parent=1 // pred_region
      _
    $region17: #{tpu_custom_call.1} parent=1 // pred_fallthru
      _
    // Predicated region
    $region18: #{tpu_custom_call.1} parent=1 // pred_check
      _
    $region19: #{tpu_custom_call.1} parent=1 // pred_check_branch
      %30 = sbr.rel (0) target = $region21
    $region20: #{tpu_custom_call.1} parent=1 // pred_region
      _
    $region21: #{tpu_custom_call.1} parent=1 // pred_fallthru
      _
    // Predicated region
    $region22: #{tpu_custom_call.1} parent=1 // pred_check
      _
    $region23: #{tpu_custom_call.1} parent=1 // pred_check_branch
      %32 = sbr.rel (0) target = $region25
    $region24: #{tpu_custom_call.1} parent=1 // pred_region
      _
    $region25: #{tpu_custom_call.1} parent=1 // pred_fallthru
      _
    // Predicated region
    $region26: #{tpu_custom_call.1} parent=1 // pred_check
      _
    $region27: #{tpu_custom_call.1} parent=1 // pred_check_branch
      %34 = sbr.rel (0) target = $region29
    $region28: #{tpu_custom_call.1} parent=1 // pred_region
      _
    $region29: #{tpu_custom_call.1} parent=1 // pred_fallthru
      _
    // Predicated region
    $region30: #{tpu_custom_call.1} parent=1 // pred_check
      _
    $region31: #{tpu_custom_call.1} parent=1 // pred_check_branch
      %36 = sbr.rel (0) target = $region33
    $region32: #{tpu_custom_call.1} parent=1 // pred_region
      _
    $region33: #{tpu_custom_call.1} parent=1 // pred_fallthru
      _
    // Predicated region
    $region34: #{tpu_custom_call.1} parent=1 // pred_check
      _
    $region35: #{tpu_custom_call.1} parent=1 // pred_check_branch
      %38 = sbr.rel (0) target = $region37
    $region36: #{tpu_custom_call.1} parent=1 // pred_region
      _
    $region37: #{tpu_custom_call.1} parent=1 // pred_fallthru
      _
    // Predicated region
    $region38: #{tpu_custom_call.1} parent=1 // pred_check
      _
    $region39: #{tpu_custom_call.1} parent=1 // pred_check_branch
      %40 = sbr.rel (0) target = $region41
    $region40: #{tpu_custom_call.1} parent=1 // pred_region
      _
    $region41: #{tpu_custom_call.1} parent=1 // pred_fallthru
      _
    // Predicated region
    $region42: #{tpu_custom_call.1} parent=1 // pred_check
      _
    $region43: #{tpu_custom_call.1} parent=1 // pred_check_branch
      %42 = sbr.rel (0) target = $region45
    $region44: #{tpu_custom_call.1} parent=1 // pred_region
      _
    $region45: #{tpu_custom_call.1} parent=1 // pred_fallthru
      _
    // Predicated region
    $region46: #{tpu_custom_call.1} parent=1 // pred_check
      _
    $region47: #{tpu_custom_call.1} parent=1 // pred_check_branch
      %44 = sbr.rel (0) target = $region49
    $region48: #{tpu_custom_call.1} parent=1 // pred_region
      _
    $region49: #{tpu_custom_call.1} parent=1 // pred_fallthru
      _
    // Predicated region
    $region50: #{tpu_custom_call.1} parent=1 // pred_check
      _
    $region51: #{tpu_custom_call.1} parent=1 // pred_check_branch
      %46 = sbr.rel (0) target = $region53
    $region52: #{tpu_custom_call.1} parent=1 // pred_region
      _
    $region53: #{tpu_custom_call.1} parent=1 // pred_fallthru
      _
    // Predicated region
    $region54: #{tpu_custom_call.1} parent=1 // pred_check
      _
    $region55: #{tpu_custom_call.1} parent=1 // pred_check_branch
      %48 = sbr.rel (0) target = $region57
    $region56: #{tpu_custom_call.1} parent=1 // pred_region
      _
    $region57: #{tpu_custom_call.1} parent=1 // pred_fallthru
      _
    // Predicated region
    $region58: #{tpu_custom_call.1} parent=1 // pred_check
      _
    $region59: #{tpu_custom_call.1} parent=1 // pred_check_branch
      %50 = sbr.rel (0) target = $region61
    $region60: #{tpu_custom_call.1} parent=1 // pred_region
      _
    $region61: #{tpu_custom_call.1} parent=1 // pred_fallthru
      _
    %v52 = vld [vmem:[%s0] sm:$0x3]
    %v53 = vld [vmem:[%s1] sm:$0xf]
    %v54 = vld [vmem:[%s1 + $0x4] sm:$0xf]
    %v55 = vld [vmem:[%s1 + $0x8] sm:$0xf]
    %v56 = vld [vmem:[%s1 + $0xc] sm:$0xf]
    %v57 = vld [vmem:[%s2] sm:$0xff]
    %v58 = vld [vmem:[%s2 + $0x8] sm:$0xff]
    %v59 = vld [vmem:[%s2 + $0x10] sm:$0xff]
    %v60 = vld [vmem:[%s2 + $0x18] sm:$0xff]
    %62 = vset.pattern.permute.xlu0 0
    %63 = vperm.xlu0 %62, %v57
    %v64 = vpop.permute.xlu0 %63
    %67 = vset.pattern.permute.xlu0 0
    %68 = vperm.xlu0 %67, %v58
    %v69 = vpop.permute.xlu0 %68
    %72 = vset.pattern.permute.xlu0 0
    %73 = vperm.xlu0 %72, %v59
    %v74 = vpop.permute.xlu0 %73
    %77 = vset.pattern.permute.xlu0 0
    %78 = vperm.xlu0 %77, %v60
    %v79 = vpop.permute.xlu0 %78
    %v85 = vunpack.c.l.b16 %v53
    %v86 = vunpack.c.l.b16 %v54
    %v87 = vunpack.c.l.b16 %v55
    %v88 = vunpack.c.l.b16 %v56
    %v89 = vpack.c.b16 %v86, %v85
    %v90 = vpack.c.b16 %v88, %v87
    %vm91 = vcmask 31744
    %v93 = vsel %vm91, %v89, 0
    %v96 = vsel %vm91, %v90, 0
    %vm98 = vcmask 1041408
    %v100 = vsel %vm98, %v52, 0
    %102 = vmatprep.subr.bf16.mxu0 0
    %103 = vmatpush1.bf16.msra.mxu0 %v100
    %104 = vmatprep.subr.bf16.mxu0 0
    %105 = vmatpush1.bf16.msra.mxu0 0
    %106 = vmatprep.subr.bf16.mxu0 0
    %107 = vmatpush1.bf16.msra.mxu0 0
    %108 = vmatprep.subr.bf16.mxu0 0
    %109 = vmatpush1.bf16.msra.mxu0 0
    %110 = vmatprep.subr.bf16.mxu0 0
    %111 = vmatpush1.bf16.msra.mxu0 0
    %112 = vmatprep.subr.bf16.mxu0 0
    %113 = vmatpush1.bf16.msra.mxu0 0
    %114 = vmatprep.subr.bf16.mxu0 0
    %115 = vmatpush1.bf16.msra.mxu0 0
    %116 = vmatprep.subr.bf16.mxu0 0
    %117 = vmatpush1.bf16.msra.mxu0 0
    %118 = vmatprep.subr.bf16.mxu0 0
    %119 = vmatpush1.bf16.msra.mxu0 0
    %120 = vmatprep.subr.bf16.mxu0 0
    %121 = vmatpush1.bf16.msra.mxu0 0
    %122 = vmatprep.subr.bf16.mxu0 0
    %123 = vmatpush1.bf16.msra.mxu0 0
    %124 = vmatprep.subr.bf16.mxu0 0
    %125 = vmatpush1.bf16.msra.mxu0 0
    %126 = vmatprep.subr.bf16.mxu0 0
    %127 = vmatpush1.bf16.msra.mxu0 0
    %128 = vmatprep.subr.bf16.mxu0 0
    %129 = vmatpush1.bf16.msra.mxu0 0
    %130 = vmatprep.subr.bf16.mxu0 0
    %131 = vmatpush1.bf16.msra.mxu0 0
    %132 = vmatprep.subr.bf16.mxu0 0
    %133 = vmatpush1.bf16.msra.mxu0 0
    %134 = vmatprep.mubr.bf16.mxu0 0
    %135 = vmatmul.mubr.bf16.gmra.mrb[0].mxu0 %v93
    %v136 = vpop.f32.mrb[0].mxu0
    %v137 = vadd.f32 %v64, %v136
    %v138 = vpop.f32.mrb[0].mxu0
    %v139 = vpop.f32.mrb[0].mxu0
    %v140 = vadd.f32 %v69, %v139
    %v141 = vpop.f32.mrb[0].mxu0
    %142 = vmatprep.mubr.bf16.mxu0 0
    %143 = vmatmul.mubr.bf16.gmra.mrb[0].mxu0 %v96
    %v144 = vpop.f32.mrb[0].mxu0
    %v145 = vadd.f32 %v74, %v144
    %v146 = vpop.f32.mrb[0].mxu0
    %v147 = vpop.f32.mrb[0].mxu0
    %v148 = vadd.f32 %v79, %v147
    %v149 = vpop.f32.mrb[0].mxu0
    %150 = vdwg.mxu0
    %v151 = vmul.f32 %v137, 0.01
    %v152 = vmul.f32 %v140, 0.01
    %v153 = vmul.f32 %v145, 0.01
    %v154 = vmul.f32 %v148, 0.01
    %v155 = vmax.f32 %v137, %v151
    %v156 = vmax.f32 %v140, %v152
    %v157 = vmax.f32 %v145, %v153
    %v158 = vmax.f32 %v148, %v154
    %v159 = vpack.c.bf16 %v156, %v155
    %v160 = vpack.c.bf16 %v158, %v157
    %v161 = vld [vmem:[%s3] sm:$0xf]
    %v162 = vld [vmem:[%s3 + $0x4] sm:$0xf]
    %v163 = vld [vmem:[%s3 + $0x8] sm:$0xf]
    %v164 = vld [vmem:[%s3 + $0xc] sm:$0xf]
    %v165 = vld [vmem:[%s4] sm:$0xff]
    %v166 = vld [vmem:[%s4 + $0x8] sm:$0xff]
    %v167 = vld [vmem:[%s4 + $0x10] sm:$0xff]
    %v168 = vld [vmem:[%s4 + $0x18] sm:$0xff]
    %170 = vset.pattern.permute.xlu0 0
    %171 = vperm.xlu0 %170, %v165
    %v172 = vpop.permute.xlu0 %171
    %175 = vset.pattern.permute.xlu0 0
    %176 = vperm.xlu0 %175, %v166
    %v177 = vpop.permute.xlu0 %176
    %180 = vset.pattern.permute.xlu0 0
    %181 = vperm.xlu0 %180, %v167
    %v182 = vpop.permute.xlu0 %181
    %185 = vset.pattern.permute.xlu0 0
    %186 = vperm.xlu0 %185, %v168
    %v187 = vpop.permute.xlu0 %186
    %v193 = vunpack.c.l.b16 %v161
    %v194 = vunpack.c.l.b16 %v162
    %v195 = vunpack.c.l.b16 %v163
    %v196 = vunpack.c.l.b16 %v164
    %v197 = vpack.c.b16 %v194, %v193
    %v198 = vpack.c.b16 %v196, %v195
    %vm199 = vcmask 261120
    %v201 = vsel %vm199, %v197, 0
    %v204 = vsel %vm199, %v198, 0
    %206 = vmatprep.subr.bf16.mxu0 0
    %207 = vmatpush1.bf16.msra.mxu0 %v159
    %208 = vmatprep.subr.bf16.mxu0 0
    %209 = vmatpush1.bf16.msra.mxu0 %v160
    %210 = vmatprep.subr.bf16.mxu0 0
    %211 = vmatpush1.bf16.msra.mxu0 0
    %212 = vmatprep.subr.bf16.mxu0 0
    %213 = vmatpush1.bf16.msra.mxu0 0
    %214 = vmatprep.subr.bf16.mxu0 0
    %215 = vmatpush1.bf16.msra.mxu0 0
    %216 = vmatprep.subr.bf16.mxu0 0
    %217 = vmatpush1.bf16.msra.mxu0 0
    %218 = vmatprep.subr.bf16.mxu0 0
    %219 = vmatpush1.bf16.msra.mxu0 0
    %220 = vmatprep.subr.bf16.mxu0 0
    %221 = vmatpush1.bf16.msra.mxu0 0
    %222 = vmatprep.subr.bf16.mxu0 0
    %223 = vmatpush1.bf16.msra.mxu0 0
    %224 = vmatprep.subr.bf16.mxu0 0
    %225 = vmatpush1.bf16.msra.mxu0 0
    %226 = vmatprep.subr.bf16.mxu0 0
    %227 = vmatpush1.bf16.msra.mxu0 0
    %228 = vmatprep.subr.bf16.mxu0 0
    %229 = vmatpush1.bf16.msra.mxu0 0
    %230 = vmatprep.subr.bf16.mxu0 0
    %231 = vmatpush1.bf16.msra.mxu0 0
    %232 = vmatprep.subr.bf16.mxu0 0
    %233 = vmatpush1.bf16.msra.mxu0 0
    %234 = vmatprep.subr.bf16.mxu0 0
    %235 = vmatpush1.bf16.msra.mxu0 0
    %236 = vmatprep.subr.bf16.mxu0 0
    %237 = vmatpush1.bf16.msra.mxu0 0
    %238 = vmatprep.mubr.bf16.mxu0 0
    %239 = vmatmul.mubr.bf16.gmra.mrb[0].mxu0 %v201
    %v240 = vpop.f32.mrb[0].mxu0
    %v241 = vadd.f32 %v172, %v240
    %v242 = vpop.f32.mrb[0].mxu0
    %v243 = vpop.f32.mrb[0].mxu0
    %v244 = vadd.f32 %v177, %v243
    %v245 = vpop.f32.mrb[0].mxu0
    %246 = vmatprep.mubr.bf16.mxu0 0
    %247 = vmatmul.mubr.bf16.gmra.mrb[0].mxu0 %v204
    %v248 = vpop.f32.mrb[0].mxu0
    %v249 = vadd.f32 %v182, %v248
    %v250 = vpop.f32.mrb[0].mxu0
    %v251 = vpop.f32.mrb[0].mxu0
    %v252 = vadd.f32 %v187, %v251
    %v253 = vpop.f32.mrb[0].mxu0
    %254 = vdwg.mxu0
    %v255 = vmul.f32 %v241, 0.01
    %v256 = vmul.f32 %v244, 0.01
    %v257 = vmul.f32 %v249, 0.01
    %v258 = vmul.f32 %v252, 0.01
    %v259 = vmax.f32 %v241, %v255
    %v260 = vmax.f32 %v244, %v256
    %v261 = vmax.f32 %v249, %v257
    %v262 = vmax.f32 %v252, %v258
    %v263 = vpack.c.bf16 %v260, %v259
    %v264 = vpack.c.bf16 %v262, %v261
    %v265 = vld [vmem:[%s5] sm:$0xf]
    %v266 = vld [vmem:[%s5 + $0x4] sm:$0xf]
    %v267 = vld [vmem:[%s5 + $0x8] sm:$0xf]
    %v268 = vld [vmem:[%s5 + $0xc] sm:$0xf]
    %v269 = vld [vmem:[%s6] sm:$0xff]
    %v270 = vld [vmem:[%s6 + $0x8] sm:$0xff]
    %v271 = vld [vmem:[%s6 + $0x10] sm:$0xff]
    %v272 = vld [vmem:[%s6 + $0x18] sm:$0xff]
    %274 = vset.pattern.permute.xlu0 0
    %275 = vperm.xlu0 %274, %v269
    %v276 = vpop.permute.xlu0 %275
    %279 = vset.pattern.permute.xlu0 0
    %280 = vperm.xlu0 %279, %v270
    %v281 = vpop.permute.xlu0 %280
    %284 = vset.pattern.permute.xlu0 0
    %285 = vperm.xlu0 %284, %v271
    %v286 = vpop.permute.xlu0 %285
    %289 = vset.pattern.permute.xlu0 0
    %290 = vperm.xlu0 %289, %v272
    %v291 = vpop.permute.xlu0 %290
    %v297 = vunpack.c.l.b16 %v265
    %v298 = vunpack.c.l.b16 %v266
    %v299 = vunpack.c.l.b16 %v267
    %v300 = vunpack.c.l.b16 %v268
    %v301 = vpack.c.b16 %v298, %v297
    %v302 = vpack.c.b16 %v300, %v299
    %v304 = vsel %vm199, %v301, 0
    %v307 = vsel %vm199, %v302, 0
    %309 = vmatprep.subr.bf16.mxu0 0
    %310 = vmatpush1.bf16.msra.mxu0 %v263
    %311 = vmatprep.subr.bf16.mxu0 0
    %312 = vmatpush1.bf16.msra.mxu0 %v264
    %313 = vmatprep.subr.bf16.mxu0 0
    %314 = vmatpush1.bf16.msra.mxu0 0
    %315 = vmatprep.subr.bf16.mxu0 0
    %316 = vmatpush1.bf16.msra.mxu0 0
    %317 = vmatprep.subr.bf16.mxu0 0
    %318 = vmatpush1.bf16.msra.mxu0 0
    %319 = vmatprep.subr.bf16.mxu0 0
    %320 = vmatpush1.bf16.msra.mxu0 0
    %321 = vmatprep.subr.bf16.mxu0 0
    %322 = vmatpush1.bf16.msra.mxu0 0
    %323 = vmatprep.subr.bf16.mxu0 0
    %324 = vmatpush1.bf16.msra.mxu0 0
    %325 = vmatprep.subr.bf16.mxu0 0
    %326 = vmatpush1.bf16.msra.mxu0 0
    %327 = vmatprep.subr.bf16.mxu0 0
    %328 = vmatpush1.bf16.msra.mxu0 0
    %329 = vmatprep.subr.bf16.mxu0 0
    %330 = vmatpush1.bf16.msra.mxu0 0
    %331 = vmatprep.subr.bf16.mxu0 0
    %332 = vmatpush1.bf16.msra.mxu0 0
    %333 = vmatprep.subr.bf16.mxu0 0
    %334 = vmatpush1.bf16.msra.mxu0 0
    %335 = vmatprep.subr.bf16.mxu0 0
    %336 = vmatpush1.bf16.msra.mxu0 0
    %337 = vmatprep.subr.bf16.mxu0 0
    %338 = vmatpush1.bf16.msra.mxu0 0
    %339 = vmatprep.subr.bf16.mxu0 0
    %340 = vmatpush1.bf16.msra.mxu0 0
    %341 = vmatprep.mubr.bf16.mxu0 0
    %342 = vmatmul.mubr.bf16.gmra.mrb[0].mxu0 %v304
    %v343 = vpop.f32.mrb[0].mxu0
    %v344 = vadd.f32 %v276, %v343
    %v345 = vpop.f32.mrb[0].mxu0
    %v346 = vpop.f32.mrb[0].mxu0
    %v347 = vadd.f32 %v281, %v346
    %v348 = vpop.f32.mrb[0].mxu0
    %349 = vmatprep.mubr.bf16.mxu0 0
    %350 = vmatmul.mubr.bf16.gmra.mrb[0].mxu0 %v307
    %v351 = vpop.f32.mrb[0].mxu0
    %v352 = vadd.f32 %v286, %v351
    %v353 = vpop.f32.mrb[0].mxu0
    %v354 = vpop.f32.mrb[0].mxu0
    %v355 = vadd.f32 %v291, %v354
    %v356 = vpop.f32.mrb[0].mxu0
    %357 = vdwg.mxu0
    %v358 = vmul.f32 %v344, 0.01
    %v359 = vmul.f32 %v347, 0.01
    %v360 = vmul.f32 %v352, 0.01
    %v361 = vmul.f32 %v355, 0.01
    %v362 = vmax.f32 %v344, %v358
    %v363 = vmax.f32 %v347, %v359
    %v364 = vmax.f32 %v352, %v360
    %v365 = vmax.f32 %v355, %v361
    %v366 = vpack.c.bf16 %v363, %v362
    %v367 = vpack.c.bf16 %v365, %v364
    %v368 = vld [vmem:[%s7] sm:$0xf]
    %v369 = vld [vmem:[%s7 + $0x4] sm:$0xf]
    %v370 = vld [vmem:[%s7 + $0x8] sm:$0xf]
    %v371 = vld [vmem:[%s7 + $0xc] sm:$0xf]
    %v372 = vld [vmem:[%s8] sm:$0xff]
    %v373 = vld [vmem:[%s8 + $0x8] sm:$0xff]
    %v374 = vld [vmem:[%s8 + $0x10] sm:$0xff]
    %v375 = vld [vmem:[%s8 + $0x18] sm:$0xff]
    %377 = vset.pattern.permute.xlu0 0
    %378 = vperm.xlu0 %377, %v372
    %v379 = vpop.permute.xlu0 %378
    %382 = vset.pattern.permute.xlu0 0
    %383 = vperm.xlu0 %382, %v373
    %v384 = vpop.permute.xlu0 %383
    %387 = vset.pattern.permute.xlu0 0
    %388 = vperm.xlu0 %387, %v374
    %v389 = vpop.permute.xlu0 %388
    %392 = vset.pattern.permute.xlu0 0
    %393 = vperm.xlu0 %392, %v375
    %v394 = vpop.permute.xlu0 %393
    %v400 = vunpack.c.l.b16 %v368
    %v401 = vunpack.c.l.b16 %v369
    %v402 = vunpack.c.l.b16 %v370
    %v403 = vunpack.c.l.b16 %v371
    %v404 = vpack.c.b16 %v401, %v400
    %v405 = vpack.c.b16 %v403, %v402
    %v407 = vsel %vm199, %v404, 0
    %v410 = vsel %vm199, %v405, 0
    %412 = vmatprep.subr.bf16.mxu0 0
    %413 = vmatpush1.bf16.msra.mxu0 %v366
    %414 = vmatprep.subr.bf16.mxu0 0
    %415 = vmatpush1.bf16.msra.mxu0 %v367
    %416 = vmatprep.subr.bf16.mxu0 0
    %417 = vmatpush1.bf16.msra.mxu0 0
    %418 = vmatprep.subr.bf16.mxu0 0
    %419 = vmatpush1.bf16.msra.mxu0 0
    %420 = vmatprep.subr.bf16.mxu0 0
    %421 = vmatpush1.bf16.msra.mxu0 0
    %422 = vmatprep.subr.bf16.mxu0 0
    %423 = vmatpush1.bf16.msra.mxu0 0
    %424 = vmatprep.subr.bf16.mxu0 0
    %425 = vmatpush1.bf16.msra.mxu0 0
    %426 = vmatprep.subr.bf16.mxu0 0
    %427 = vmatpush1.bf16.msra.mxu0 0
    %428 = vmatprep.subr.bf16.mxu0 0
    %429 = vmatpush1.bf16.msra.mxu0 0
    %430 = vmatprep.subr.bf16.mxu0 0
    %431 = vmatpush1.bf16.msra.mxu0 0
    %432 = vmatprep.subr.bf16.mxu0 0
    %433 = vmatpush1.bf16.msra.mxu0 0
    %434 = vmatprep.subr.bf16.mxu0 0
    %435 = vmatpush1.bf16.msra.mxu0 0
    %436 = vmatprep.subr.bf16.mxu0 0
    %437 = vmatpush1.bf16.msra.mxu0 0
    %438 = vmatprep.subr.bf16.mxu0 0
    %439 = vmatpush1.bf16.msra.mxu0 0
    %440 = vmatprep.subr.bf16.mxu0 0
    %441 = vmatpush1.bf16.msra.mxu0 0
    %442 = vmatprep.subr.bf16.mxu0 0
    %443 = vmatpush1.bf16.msra.mxu0 0
    %444 = vmatprep.mubr.bf16.mxu0 0
    %445 = vmatmul.mubr.bf16.gmra.mrb[0].mxu0 %v407
    %v446 = vpop.f32.mrb[0].mxu0
    %v447 = vadd.f32 %v379, %v446
    %v448 = vpop.f32.mrb[0].mxu0
    %v449 = vpop.f32.mrb[0].mxu0
    %v450 = vadd.f32 %v384, %v449
    %v451 = vpop.f32.mrb[0].mxu0
    %452 = vmatprep.mubr.bf16.mxu0 0
    %453 = vmatmul.mubr.bf16.gmra.mrb[0].mxu0 %v410
    %v454 = vpop.f32.mrb[0].mxu0
    %v455 = vadd.f32 %v389, %v454
    %v456 = vpop.f32.mrb[0].mxu0
    %v457 = vpop.f32.mrb[0].mxu0
    %v458 = vadd.f32 %v394, %v457
    %v459 = vpop.f32.mrb[0].mxu0
    %460 = vdwg.mxu0
    %v461 = vmul.f32 %v447, 0.01
    %v462 = vmul.f32 %v450, 0.01
    %v463 = vmul.f32 %v455, 0.01
    %v464 = vmul.f32 %v458, 0.01
    %v465 = vmax.f32 %v447, %v461
    %v466 = vmax.f32 %v450, %v462
    %v467 = vmax.f32 %v455, %v463
    %v468 = vmax.f32 %v458, %v464
    %v469 = vpack.c.bf16 %v466, %v465
    %v470 = vpack.c.bf16 %v468, %v467
    %v471 = vld [vmem:[%s9] sm:$0xf]
    %v472 = vld [vmem:[%s9 + $0x4] sm:$0xf]
    %v473 = vld [vmem:[%s9 + $0x8] sm:$0xf]
    %v474 = vld [vmem:[%s9 + $0xc] sm:$0xf]
    %v475 = vld [vmem:[%s10] sm:$0xff]
    %v476 = vld [vmem:[%s10 + $0x8] sm:$0xff]
    %v477 = vld [vmem:[%s10 + $0x10] sm:$0xff]
    %v478 = vld [vmem:[%s10 + $0x18] sm:$0xff]
    %480 = vset.pattern.permute.xlu0 0
    %481 = vperm.xlu0 %480, %v475
    %v482 = vpop.permute.xlu0 %481
    %485 = vset.pattern.permute.xlu0 0
    %486 = vperm.xlu0 %485, %v476
    %v487 = vpop.permute.xlu0 %486
    %490 = vset.pattern.permute.xlu0 0
    %491 = vperm.xlu0 %490, %v477
    %v492 = vpop.permute.xlu0 %491
    %495 = vset.pattern.permute.xlu0 0
    %496 = vperm.xlu0 %495, %v478
    %v497 = vpop.permute.xlu0 %496
    %v503 = vunpack.c.l.b16 %v471
    %v504 = vunpack.c.l.b16 %v472
    %v505 = vunpack.c.l.b16 %v473
    %v506 = vunpack.c.l.b16 %v474
    %v507 = vpack.c.b16 %v504, %v503
    %v508 = vpack.c.b16 %v506, %v505
    %v510 = vsel %vm199, %v507, 0
    %v513 = vsel %vm199, %v508, 0
    %515 = vmatprep.subr.bf16.mxu0 0
    %516 = vmatpush1.bf16.msra.mxu0 %v469
    %517 = vmatprep.subr.bf16.mxu0 0
    %518 = vmatpush1.bf16.msra.mxu0 %v470
    %519 = vmatprep.subr.bf16.mxu0 0
    %520 = vmatpush1.bf16.msra.mxu0 0
    %521 = vmatprep.subr.bf16.mxu0 0
    %522 = vmatpush1.bf16.msra.mxu0 0
    %523 = vmatprep.subr.bf16.mxu0 0
    %524 = vmatpush1.bf16.msra.mxu0 0
    %525 = vmatprep.subr.bf16.mxu0 0
    %526 = vmatpush1.bf16.msra.mxu0 0
    %527 = vmatprep.subr.bf16.mxu0 0
    %528 = vmatpush1.bf16.msra.mxu0 0
    %529 = vmatprep.subr.bf16.mxu0 0
    %530 = vmatpush1.bf16.msra.mxu0 0
    %531 = vmatprep.subr.bf16.mxu0 0
    %532 = vmatpush1.bf16.msra.mxu0 0
    %533 = vmatprep.subr.bf16.mxu0 0
    %534 = vmatpush1.bf16.msra.mxu0 0
    %535 = vmatprep.subr.bf16.mxu0 0
    %536 = vmatpush1.bf16.msra.mxu0 0
    %537 = vmatprep.subr.bf16.mxu0 0
    %538 = vmatpush1.bf16.msra.mxu0 0
    %539 = vmatprep.subr.bf16.mxu0 0
    %540 = vmatpush1.bf16.msra.mxu0 0
    %541 = vmatprep.subr.bf16.mxu0 0
    %542 = vmatpush1.bf16.msra.mxu0 0
    %543 = vmatprep.subr.bf16.mxu0 0
    %544 = vmatpush1.bf16.msra.mxu0 0
    %545 = vmatprep.subr.bf16.mxu0 0
    %546 = vmatpush1.bf16.msra.mxu0 0
    %547 = vmatprep.mubr.bf16.mxu0 0
    %548 = vmatmul.mubr.bf16.gmra.mrb[0].mxu0 %v510
    %v549 = vpop.f32.mrb[0].mxu0
    %v550 = vadd.f32 %v482, %v549
    %v551 = vpop.f32.mrb[0].mxu0
    %v552 = vpop.f32.mrb[0].mxu0
    %v553 = vadd.f32 %v487, %v552
    %v554 = vpop.f32.mrb[0].mxu0
    %555 = vmatprep.mubr.bf16.mxu0 0
    %556 = vmatmul.mubr.bf16.gmra.mrb[0].mxu0 %v513
    %v557 = vpop.f32.mrb[0].mxu0
    %v558 = vadd.f32 %v492, %v557
    %v559 = vpop.f32.mrb[0].mxu0
    %v560 = vpop.f32.mrb[0].mxu0
    %v561 = vadd.f32 %v497, %v560
    %v562 = vpop.f32.mrb[0].mxu0
    %563 = vdwg.mxu0
    %v564 = vmul.f32 %v550, 0.01
    %v565 = vmul.f32 %v553, 0.01
    %v566 = vmul.f32 %v558, 0.01
    %v567 = vmul.f32 %v561, 0.01
    %v568 = vmax.f32 %v550, %v564
    %v569 = vmax.f32 %v553, %v565
    %v570 = vmax.f32 %v558, %v566
    %v571 = vmax.f32 %v561, %v567
    %v572 = vpack.c.bf16 %v569, %v568
    %v573 = vpack.c.bf16 %v571, %v570
    %v574 = vld [vmem:[%s11] sm:$0xf]
    %v575 = vld [vmem:[%s11 + $0x4] sm:$0xf]
    %v576 = vld [vmem:[%s11 + $0x8] sm:$0xf]
    %v577 = vld [vmem:[%s11 + $0xc] sm:$0xf]
    %v578 = vld [vmem:[%s12] sm:$0xff]
    %v579 = vld [vmem:[%s12 + $0x8] sm:$0xff]
    %v580 = vld [vmem:[%s12 + $0x10] sm:$0xff]
    %v581 = vld [vmem:[%s12 + $0x18] sm:$0xff]
    %583 = vset.pattern.permute.xlu0 0
    %584 = vperm.xlu0 %583, %v578
    %v585 = vpop.permute.xlu0 %584
    %588 = vset.pattern.permute.xlu0 0
    %589 = vperm.xlu0 %588, %v579
    %v590 = vpop.permute.xlu0 %589
    %593 = vset.pattern.permute.xlu0 0
    %594 = vperm.xlu0 %593, %v580
    %v595 = vpop.permute.xlu0 %594
    %598 = vset.pattern.permute.xlu0 0
    %599 = vperm.xlu0 %598, %v581
    %v600 = vpop.permute.xlu0 %599
    %v606 = vunpack.c.l.b16 %v574
    %v607 = vunpack.c.l.b16 %v575
    %v608 = vunpack.c.l.b16 %v576
    %v609 = vunpack.c.l.b16 %v577
    %v610 = vpack.c.b16 %v607, %v606
    %v611 = vpack.c.b16 %v609, %v608
    %v613 = vsel %vm199, %v610, 0
    %v616 = vsel %vm199, %v611, 0
    %618 = vmatprep.subr.bf16.mxu0 0
    %619 = vmatpush1.bf16.msra.mxu0 %v572
    %620 = vmatprep.subr.bf16.mxu0 0
    %621 = vmatpush1.bf16.msra.mxu0 %v573
    %622 = vmatprep.subr.bf16.mxu0 0
    %623 = vmatpush1.bf16.msra.mxu0 0
    %624 = vmatprep.subr.bf16.mxu0 0
    %625 = vmatpush1.bf16.msra.mxu0 0
    %626 = vmatprep.subr.bf16.mxu0 0
    %627 = vmatpush1.bf16.msra.mxu0 0
    %628 = vmatprep.subr.bf16.mxu0 0
    %629 = vmatpush1.bf16.msra.mxu0 0
    %630 = vmatprep.subr.bf16.mxu0 0
    %631 = vmatpush1.bf16.msra.mxu0 0
    %632 = vmatprep.subr.bf16.mxu0 0
    %633 = vmatpush1.bf16.msra.mxu0 0
    %634 = vmatprep.subr.bf16.mxu0 0
    %635 = vmatpush1.bf16.msra.mxu0 0
    %636 = vmatprep.subr.bf16.mxu0 0
    %637 = vmatpush1.bf16.msra.mxu0 0
    %638 = vmatprep.subr.bf16.mxu0 0
    %639 = vmatpush1.bf16.msra.mxu0 0
    %640 = vmatprep.subr.bf16.mxu0 0
    %641 = vmatpush1.bf16.msra.mxu0 0
    %642 = vmatprep.subr.bf16.mxu0 0
    %643 = vmatpush1.bf16.msra.mxu0 0
    %644 = vmatprep.subr.bf16.mxu0 0
    %645 = vmatpush1.bf16.msra.mxu0 0
    %646 = vmatprep.subr.bf16.mxu0 0
    %647 = vmatpush1.bf16.msra.mxu0 0
    %648 = vmatprep.subr.bf16.mxu0 0
    %649 = vmatpush1.bf16.msra.mxu0 0
    %650 = vmatprep.mubr.bf16.mxu0 0
    %651 = vmatmul.mubr.bf16.gmra.mrb[0].mxu0 %v613
    %v652 = vpop.f32.mrb[0].mxu0
    %v653 = vadd.f32 %v585, %v652
    %v654 = vpop.f32.mrb[0].mxu0
    %v655 = vpop.f32.mrb[0].mxu0
    %v656 = vadd.f32 %v590, %v655
    %v657 = vpop.f32.mrb[0].mxu0
    %658 = vmatprep.mubr.bf16.mxu0 0
    %659 = vmatmul.mubr.bf16.gmra.mrb[0].mxu0 %v616
    %v660 = vpop.f32.mrb[0].mxu0
    %v661 = vadd.f32 %v595, %v660
    %v662 = vpop.f32.mrb[0].mxu0
    %v663 = vpop.f32.mrb[0].mxu0
    %v664 = vadd.f32 %v600, %v663
    %v665 = vpop.f32.mrb[0].mxu0
    %666 = vdwg.mxu0
    %v667 = vmul.f32 %v653, 0.01
    %v668 = vmul.f32 %v656, 0.01
    %v669 = vmul.f32 %v661, 0.01
    %v670 = vmul.f32 %v664, 0.01
    %v671 = vmax.f32 %v653, %v667
    %v672 = vmax.f32 %v656, %v668
    %v673 = vmax.f32 %v661, %v669
    %v674 = vmax.f32 %v664, %v670
    %v675 = vpack.c.bf16 %v672, %v671
    %v676 = vpack.c.bf16 %v674, %v673
    %v677 = vld [vmem:[%s13] sm:$0xf]
    %v678 = vld [vmem:[%s14] sm:$0xff]
    %680 = vset.pattern.permute.xlu0 0
    %681 = vperm.xlu0 %680, %v678
    %v682 = vpop.permute.xlu0 %681
    %v685 = vsel %vm199, %v677, 0
    %687 = vmatprep.subr.bf16.mxu0 0
    %688 = vmatpush1.bf16.msra.mxu0 %v675
    %689 = vmatprep.subr.bf16.mxu0 0
    %690 = vmatpush1.bf16.msra.mxu0 %v676
    %691 = vmatprep.subr.bf16.mxu0 0
    %692 = vmatpush1.bf16.msra.mxu0 0
    %693 = vmatprep.subr.bf16.mxu0 0
    %694 = vmatpush1.bf16.msra.mxu0 0
    %695 = vmatprep.subr.bf16.mxu0 0
    %696 = vmatpush1.bf16.msra.mxu0 0
    %697 = vmatprep.subr.bf16.mxu0 0
    %698 = vmatpush1.bf16.msra.mxu0 0
    %699 = vmatprep.subr.bf16.mxu0 0
    %700 = vmatpush1.bf16.msra.mxu0 0
    %701 = vmatprep.subr.bf16.mxu0 0
    %702 = vmatpush1.bf16.msra.mxu0 0
    %703 = vmatprep.subr.bf16.mxu0 0
    %704 = vmatpush1.bf16.msra.mxu0 0
    %705 = vmatprep.subr.bf16.mxu0 0
    %706 = vmatpush1.bf16.msra.mxu0 0
    %707 = vmatprep.subr.bf16.mxu0 0
    %708 = vmatpush1.bf16.msra.mxu0 0
    %709 = vmatprep.subr.bf16.mxu0 0
    %710 = vmatpush1.bf16.msra.mxu0 0
    %711 = vmatprep.subr.bf16.mxu0 0
    %712 = vmatpush1.bf16.msra.mxu0 0
    %713 = vmatprep.subr.bf16.mxu0 0
    %714 = vmatpush1.bf16.msra.mxu0 0
    %715 = vmatprep.subr.bf16.mxu0 0
    %716 = vmatpush1.bf16.msra.mxu0 0
    %717 = vmatprep.subr.bf16.mxu0 0
    %718 = vmatpush1.bf16.msra.mxu0 0
    %719 = vmatprep.mubr.bf16.mxu0 0
    %720 = vmatmul.mubr.bf16.gmra.mrb[0].mxu0 %v685
    %v721 = vpop.f32.mrb[0].mxu0
    %v722 = vadd.f32 %v682, %v721
    %v723 = vpop.f32.mrb[0].mxu0
    %v724 = vpop.f32.mrb[0].mxu0
    %v725 = vpop.f32.mrb[0].mxu0
    %726 = vdwg.mxu0
    %v727 = vmul.f32 %v722, 0.01
    %v728 = vmax.f32 %v722, %v727
    %729 = vst [vmem:[#allocation2] sm:$0xff] %v728
    // Predicated region
    $region62: #{tpu_custom_call.1} parent=1 // pred_check
      _
    $region63: #{tpu_custom_call.1} parent=1 // pred_check_branch
      %731 = sbr.rel (0) target = $region65
    $region64: #{tpu_custom_call.1} parent=1 // pred_region
      %s733 = ssub.s32 128, 128
      %734 = vsyncadd [#allocation3], %s733
      %s736 = sshll.u32 [#allocation2], 4
      %s737 = int_to_ptr.vmem [resolvable:$true] %s736
      %739 = dma.vmem_to_hbm [thread:$0]  %s737, 128, %s15, [#allocation3]
    $region65: #{tpu_custom_call.1} parent=1 // pred_fallthru
      _
    // Predicated region
    $region66: #{tpu_custom_call.1} parent=1 // pred_check
      _
    $region67: #{tpu_custom_call.1} parent=1 // pred_check_branch
      %741 = sbr.rel (0) target = $region69
    $region68: #{tpu_custom_call.1} parent=1 // pred_region
      %742 = dma.done [#allocation3], 128
    $region69: #{tpu_custom_call.1} parent=1 // pred_fallthru
      _
    %743 = vsyncpa [#allocation3], 1

</llo_original>
